<compile_context>
chip_gen: v5e
topology: v5e:2x2
jax: 0.10.0
libtpu: 0.0.40
codegen_flags: <defaults>
</compile_context>

<pallas_src>
from functools import partial

import jax
import jax.numpy as jnp
from jax import lax
from jax.experimental import pallas as pl
from jax.experimental.pallas import tpu as pltpu


LANE = 128


def _fused_mlp_kernel(ids_ref, emb_ref, w1_ref, b1_ref, w2_ref, b2_ref,
                      wf_ref, bf_ref, o_ref):
    """Fused hot path for one tile of token rows, entirely in VMEM.

    ids_ref : (tile, 1)      int32 token ids
    emb_ref : (VOCAB, H)     embedding table (resident)
    w*_ref  : weights pre-transposed to (in_features, out_features)
    o_ref   : (tile, O_pad)  lane-dense (128-wide) output tile
    """
    ids = ids_ref[...]                                   # (tile, 1)
    tile = ids.shape[0]
    vocab = emb_ref.shape[0]

    # Embedding gather on the MXU: one-hot(ids) @ table.  Exact in f32 since
    # every reduction has exactly one non-zero (0/1) term.
    one_hot = (ids == lax.broadcasted_iota(jnp.int32, (tile, vocab), 1)
               ).astype(jnp.float32)
    x = jnp.dot(one_hot, emb_ref[...], preferred_element_type=jnp.float32)

    h1 = jnp.maximum(
        jnp.dot(x, w1_ref[...], preferred_element_type=jnp.float32) + b1_ref[...],
        0.0)
    h2 = jnp.maximum(
        jnp.dot(h1, w2_ref[...], preferred_element_type=jnp.float32) + b2_ref[...],
        0.0)
    out = jnp.dot(h2, wf_ref[...], preferred_element_type=jnp.float32) + bf_ref[...]
    o_ref[...] = out.astype(o_ref.dtype)


def _round_up(a, m):
    return ((a + m - 1) // m) * m


def _cdiv(a, b):
    return -(-a // b)


def _choose_tile(n_rows, tile_rows):
    """Balanced row-tile size (multiple of 8, >=2 grid steps when possible)."""
    n8 = _round_up(max(n_rows, 1), 8)
    steps = max(1, _cdiv(n_rows, tile_rows))
    if n8 >= 16:
        steps = max(steps, 2)          # let v7x's two TCs both engage
    return _round_up(_cdiv(n8, steps), 8)


def prepare_final_layer(wf, bf):
    """Hoisted, once-per-model prep: zero-pad the final layer to 128 lanes so
    the kernel's output stores are full-width (no masked vst)."""
    H, O = wf.shape
    O_pad = _round_up(max(O, LANE), LANE)
    wf_p = jnp.zeros((H, O_pad), wf.dtype).at[:, :O].set(wf)
    bf_p = jnp.zeros((1, O_pad), bf.dtype).at[:, :O].set(bf)
    return wf_p, bf_p


@partial(jax.jit, static_argnames=("out_features", "tile_rows"))
def two_layer_rnn_forward(ids, emb_table, w1, b1, w2, b2, wf_p, bf_p,
                          *, out_features, tile_rows=512):
    """ids: (B, S) integer tokens.  Weights are (in_features, out_features);
    wf_p/bf_p are the lane-padded final layer from prepare_final_layer.
    Returns (B, S, out_features) float32."""
    B, S = ids.shape
    VOCAB, H = emb_table.shape
    O_pad = wf_p.shape[1]
    O = out_features
    N = B * S

    tile = _choose_tile(N, tile_rows)
    N_pad = _round_up(N, tile)
    grid = (N_pad // tile,)

    # Token ids as an (N_pad, 1) column; padded rows use id 0 (harmless, their
    # outputs are sliced away below).  Cheap pad, no scatter.
    ids_col = ids.reshape(-1, 1).astype(jnp.int32)
    if N_pad > N:
        ids_col = jnp.pad(ids_col, ((0, N_pad - N), (0, 0)))

    out = pl.pallas_call(
        _fused_mlp_kernel,
        out_shape=jax.ShapeDtypeStruct((N_pad, O_pad), jnp.float32),
        grid_spec=pltpu.PrefetchScalarGridSpec(
            num_scalar_prefetch=0,
            grid=grid,
            in_specs=[
                pl.BlockSpec((tile, 1), lambda i: (i, 0)),     # token ids tile
                pl.BlockSpec((VOCAB, H), lambda i: (0, 0)),    # emb table (resident)
                pl.BlockSpec((H, H), lambda i: (0, 0)),        # w1
                pl.BlockSpec((1, H), lambda i: (0, 0)),        # b1
                pl.BlockSpec((H, H), lambda i: (0, 0)),        # w2
                pl.BlockSpec((1, H), lambda i: (0, 0)),        # b2
                pl.BlockSpec((H, O_pad), lambda i: (0, 0)),    # wf (lane-padded)
                pl.BlockSpec((1, O_pad), lambda i: (0, 0)),    # bf (lane-padded)
            ],
            out_specs=pl.BlockSpec((tile, O_pad), lambda i: (i, 0)),
        ),
        compiler_params=pltpu.CompilerParams(
            dimension_semantics=("parallel",),   # megacore-shardable on v7x
        ),
    )(ids_col, emb_table, w1, b1, w2, b2, wf_p, bf_p)

    return out[:N, :O].reshape(B, S, O)


def _reference(ids, emb_table, w1, b1, w2, b2, wf, bf):
    x = jnp.take(emb_table, ids.reshape(-1), axis=0)
    h1 = jnp.maximum(x @ w1 + b1, 0.0)
    h2 = jnp.maximum(h1 @ w2 + b2, 0.0)
    out = h2 @ wf + bf
    B, S = ids.shape
    return out.reshape(B, S, wf.shape[1])


if __name__ == "__main__":
    # Small shapes consistent with the module:
    #   input_size (vocab) = 16, hidden_size = 32, output_size = 8
    #   batch = 2, seq = 8
    VOCAB, H, O = 16, 32, 8
    B, S = 2, 8

    key = jax.random.PRNGKey(0)
    k_ids, k_emb, k_w1, k_b1, k_w2, k_b2, k_wf, k_bf = jax.random.split(key, 8)

    ids = jax.random.randint(k_ids, (B, S), 0, VOCAB, dtype=jnp.int32)

    # Deterministic parameter init; weights pre-transposed to
    # (in_features, out_features) so the kernel computes y = x @ W + b.
    emb_table = jax.random.normal(k_emb, (VOCAB, H), dtype=jnp.float32) * 0.1
    w1 = jax.random.normal(k_w1, (H, H), dtype=jnp.float32) * 0.1
    b1 = jax.random.normal(k_b1, (1, H), dtype=jnp.float32) * 0.1
    w2 = jax.random.normal(k_w2, (H, H), dtype=jnp.float32) * 0.1
    b2 = jax.random.normal(k_b2, (1, H), dtype=jnp.float32) * 0.1
    wf = jax.random.normal(k_wf, (H, O), dtype=jnp.float32) * 0.1
    bf = jax.random.normal(k_bf, (1, O), dtype=jnp.float32) * 0.1

    # Hoisted once-per-model prep (not in the per-call path).
    wf_p, bf_p = prepare_final_layer(wf, bf)
    wf_p, bf_p = jax.block_until_ready((wf_p, bf_p))

    out = two_layer_rnn_forward(ids, emb_table, w1, b1, w2, b2, wf_p, bf_p,
                                out_features=O)
    out = jax.block_until_ready(out)

    ref = _reference(ids, emb_table, w1, b1, w2, b2, wf, bf)
    assert out.shape == (B, S, O)
    assert jnp.allclose(out, ref, atol=1e-5, rtol=1e-5), "mismatch vs reference"

    print("KERNEL_OK")
</pallas_src>

<mosaic_0001>
module attributes {stable_mosaic.version = 11 : i64} {
  func.func @_fused_mlp_kernel(%arg0: i32, %arg1: memref<8x1xi32, #tpu.memory_space<vmem>>, %arg2: memref<16x32xf32, #tpu.memory_space<vmem>>, %arg3: memref<32x32xf32, #tpu.memory_space<vmem>>, %arg4: memref<1x32xf32, #tpu.memory_space<vmem>>, %arg5: memref<32x32xf32, #tpu.memory_space<vmem>>, %arg6: memref<1x32xf32, #tpu.memory_space<vmem>>, %arg7: memref<32x128xf32, #tpu.memory_space<vmem>>, %arg8: memref<1x128xf32, #tpu.memory_space<vmem>>, %arg9: memref<8x128xf32, #tpu.memory_space<vmem>>) attributes {dimension_semantics = [#tpu.dimension_semantics<parallel>], iteration_bounds = array<i64: 2>, scalar_prefetch = 0 : i64, scratch_operands = 0 : i64, tpu.core_type = #tpu.core_type<tc>, window_params = [{transform_indices = @transform_0, window_bounds = array<i64: 8, 1>}, {pipeline_mode = #tpu.pipeline_mode<synchronous>, transform_indices = @transform_1, window_bounds = array<i64: 16, 32>}, {pipeline_mode = #tpu.pipeline_mode<synchronous>, transform_indices = @transform_2, window_bounds = array<i64: 32, 32>}, {pipeline_mode = #tpu.pipeline_mode<synchronous>, transform_indices = @transform_3, window_bounds = array<i64: 1, 32>}, {pipeline_mode = #tpu.pipeline_mode<synchronous>, transform_indices = @transform_4, window_bounds = array<i64: 32, 32>}, {pipeline_mode = #tpu.pipeline_mode<synchronous>, transform_indices = @transform_5, window_bounds = array<i64: 1, 32>}, {pipeline_mode = #tpu.pipeline_mode<synchronous>, transform_indices = @transform_6, window_bounds = array<i64: 32, 128>}, {pipeline_mode = #tpu.pipeline_mode<synchronous>, transform_indices = @transform_7, window_bounds = array<i64: 1, 128>}, {transform_indices = @transform_8, window_bounds = array<i64: 8, 128>}]} {
    %c0 = arith.constant 0 : index
    %c0_0 = arith.constant 0 : index
    %0 = vector.load %arg1[%c0, %c0_0] : memref<8x1xi32, #tpu.memory_space<vmem>>, vector<8x1xi32>
    %1 = tpu.iota {dimensions = array<i32: 1>} : vector<8x16xi32>
    %2 = vector.broadcast %0 : vector<8x1xi32> to vector<8x16xi32>
    %3 = arith.cmpi eq, %2, %1 : vector<8x16xi32>
    %4 = arith.extui %3 : vector<8x16xi1> to vector<8x16xi32>
    %5 = arith.sitofp %4 : vector<8x16xi32> to vector<8x16xf32>
    %c0_1 = arith.constant 0 : index
    %c0_2 = arith.constant 0 : index
    %6 = vector.load %arg2[%c0_1, %c0_2] : memref<16x32xf32, #tpu.memory_space<vmem>>, vector<16x32xf32>
    %cst = arith.constant dense<0.000000e+00> : vector<8x32xf32>
    %7 = tpu.matmul %5, %6, %cst {dimension_numbers = #tpu.dot_dimension_numbers<[1], [0], [0], [1], [0, 0, 1, 1], [], []>} : vector<8x16xf32>, vector<16x32xf32>, vector<8x32xf32> -> vector<8x32xf32>
    %c0_3 = arith.constant 0 : index
    %c0_4 = arith.constant 0 : index
    %8 = vector.load %arg3[%c0_3, %c0_4] : memref<32x32xf32, #tpu.memory_space<vmem>>, vector<32x32xf32>
    %cst_5 = arith.constant dense<0.000000e+00> : vector<8x32xf32>
    %9 = tpu.matmul %7, %8, %cst_5 {dimension_numbers = #tpu.dot_dimension_numbers<[1], [0], [0], [1], [0, 0, 1, 1], [], []>} : vector<8x32xf32>, vector<32x32xf32>, vector<8x32xf32> -> vector<8x32xf32>
    %c0_6 = arith.constant 0 : index
    %c0_7 = arith.constant 0 : index
    %10 = vector.load %arg4[%c0_6, %c0_7] : memref<1x32xf32, #tpu.memory_space<vmem>>, vector<1x32xf32>
    %11 = vector.broadcast %10 : vector<1x32xf32> to vector<8x32xf32>
    %12 = arith.addf %9, %11 : vector<8x32xf32>
    %cst_8 = arith.constant 0.000000e+00 : f32
    %13 = vector.broadcast %cst_8 : f32 to vector<8x32xf32>
    %14 = arith.maximumf %12, %13 : vector<8x32xf32>
    %c0_9 = arith.constant 0 : index
    %c0_10 = arith.constant 0 : index
    %15 = vector.load %arg5[%c0_9, %c0_10] : memref<32x32xf32, #tpu.memory_space<vmem>>, vector<32x32xf32>
    %cst_11 = arith.constant dense<0.000000e+00> : vector<8x32xf32>
    %16 = tpu.matmul %14, %15, %cst_11 {dimension_numbers = #tpu.dot_dimension_numbers<[1], [0], [0], [1], [0, 0, 1, 1], [], []>} : vector<8x32xf32>, vector<32x32xf32>, vector<8x32xf32> -> vector<8x32xf32>
    %c0_12 = arith.constant 0 : index
    %c0_13 = arith.constant 0 : index
    %17 = vector.load %arg6[%c0_12, %c0_13] : memref<1x32xf32, #tpu.memory_space<vmem>>, vector<1x32xf32>
    %18 = vector.broadcast %17 : vector<1x32xf32> to vector<8x32xf32>
    %19 = arith.addf %16, %18 : vector<8x32xf32>
    %cst_14 = arith.constant 0.000000e+00 : f32
    %20 = vector.broadcast %cst_14 : f32 to vector<8x32xf32>
    %21 = arith.maximumf %19, %20 : vector<8x32xf32>
    %c0_15 = arith.constant 0 : index
    %c0_16 = arith.constant 0 : index
    %22 = vector.load %arg7[%c0_15, %c0_16] : memref<32x128xf32, #tpu.memory_space<vmem>>, vector<32x128xf32>
    %cst_17 = arith.constant dense<0.000000e+00> : vector<8x128xf32>
    %23 = tpu.matmul %21, %22, %cst_17 {dimension_numbers = #tpu.dot_dimension_numbers<[1], [0], [0], [1], [0, 0, 1, 1], [], []>} : vector<8x32xf32>, vector<32x128xf32>, vector<8x128xf32> -> vector<8x128xf32>
    %c0_18 = arith.constant 0 : index
    %c0_19 = arith.constant 0 : index
    %24 = vector.load %arg8[%c0_18, %c0_19] : memref<1x128xf32, #tpu.memory_space<vmem>>, vector<1x128xf32>
    %25 = vector.broadcast %24 : vector<1x128xf32> to vector<8x128xf32>
    %26 = arith.addf %23, %25 : vector<8x128xf32>
    %c0_20 = arith.constant 0 : index
    %c0_21 = arith.constant 0 : index
    %27 = vector.load %arg9[%c0_20, %c0_21] : memref<8x128xf32, #tpu.memory_space<vmem>>, vector<8x128xf32>
    tpu.vector_store %arg9[%c0_20, %c0_21], %26 {strides = array<i32>} : memref<8x128xf32, #tpu.memory_space<vmem>>, vector<8x128xf32>,
    return
  }
  func.func @transform_0(%arg0: i32) -> (i32, i32) {
    %c0_i32 = arith.constant 0 : i32
    %c0_i32_0 = arith.constant 0 : i32
    return %arg0, %c0_i32 : i32, i32
  }
  func.func @transform_1(%arg0: i32) -> (i32, i32) {
    %c0_i32 = arith.constant 0 : i32
    %c0_i32_0 = arith.constant 0 : i32
    %c0_i32_1 = arith.constant 0 : i32
    return %c0_i32, %c0_i32_0 : i32, i32
  }
  func.func @transform_2(%arg0: i32) -> (i32, i32) {
    %c0_i32 = arith.constant 0 : i32
    %c0_i32_0 = arith.constant 0 : i32
    %c0_i32_1 = arith.constant 0 : i32
    return %c0_i32, %c0_i32_0 : i32, i32
  }
  func.func @transform_3(%arg0: i32) -> (i32, i32) {
    %c0_i32 = arith.constant 0 : i32
    %c0_i32_0 = arith.constant 0 : i32
    %c0_i32_1 = arith.constant 0 : i32
    return %c0_i32, %c0_i32_0 : i32, i32
  }
  func.func @transform_4(%arg0: i32) -> (i32, i32) {
    %c0_i32 = arith.constant 0 : i32
    %c0_i32_0 = arith.constant 0 : i32
    %c0_i32_1 = arith.constant 0 : i32
    return %c0_i32, %c0_i32_0 : i32, i32
  }
  func.func @transform_5(%arg0: i32) -> (i32, i32) {
    %c0_i32 = arith.constant 0 : i32
    %c0_i32_0 = arith.constant 0 : i32
    %c0_i32_1 = arith.constant 0 : i32
    return %c0_i32, %c0_i32_0 : i32, i32
  }
  func.func @transform_6(%arg0: i32) -> (i32, i32) {
    %c0_i32 = arith.constant 0 : i32
    %c0_i32_0 = arith.constant 0 : i32
    %c0_i32_1 = arith.constant 0 : i32
    return %c0_i32, %c0_i32_0 : i32, i32
  }
  func.func @transform_7(%arg0: i32) -> (i32, i32) {
    %c0_i32 = arith.constant 0 : i32
    %c0_i32_0 = arith.constant 0 : i32
    %c0_i32_1 = arith.constant 0 : i32
    return %c0_i32, %c0_i32_0 : i32, i32
  }
  func.func @transform_8(%arg0: i32) -> (i32, i32) {
    %c0_i32 = arith.constant 0 : i32
    %c0_i32_0 = arith.constant 0 : i32
    return %arg0, %c0_i32 : i32, i32
  }
}

</mosaic_0001>

<llo_original>
// kernel: two_layer_rnn_forward.1
$region0: #{two_layer_rnn_forward.1}
  #allocation0 [shape = 'u32[]', space=smem, size = 0x4, offset = 0x4, fixed_abs, tag = 'smem constant byte address 0x4 - core index']
  #allocation1 [shape = 'u32[72,128]{1,0:T(1,128)}', space=vmem, size = 0x9000, scoped, tag = 'internal scratch']
  %s0 = inlined_call_operand.vmem [shape: s32[16,1], index: 0, kind: input, shape index: {}]
  %s1 = inlined_call_operand.vmem [shape: f32[16,32], index: 1, kind: input, shape index: {}]
  %s2 = inlined_call_operand.hbm [shape: f32[32,32], index: 2, kind: input, shape index: {}]
  %s3 = inlined_call_operand.vmem [shape: f32[1,32], index: 3, kind: input, shape index: {}]
  %s4 = inlined_call_operand.hbm [shape: f32[32,32], index: 4, kind: input, shape index: {}]
  %s5 = inlined_call_operand.vmem [shape: f32[1,32], index: 5, kind: input, shape index: {}]
  %s6 = inlined_call_operand.hbm [shape: f32[32,128], index: 6, kind: input, shape index: {}]
  %s7 = inlined_call_operand.vmem [shape: f32[1,128], index: 7, kind: input, shape index: {}]
  %s8 = inlined_call_operand.vmem [shape: f32[16,128], index: 8, kind: output, shape index: {}]
  %s9 = sld [smem:[#allocation0]]
  $region77: #{two_layer_rnn_forward.1} parent=0
    _
  %s11 = ssub.s32 1, %s9
  %s12 = scalar_select 0, %s11, %s9
  $region1: #{two_layer_rnn_forward.1} parent=0
    #allocation2 [shape = 'u8[16384]{0}', space=vmem, size = 0x4000, scoped, tag = 'input window, operand 2, single buffered']
    #allocation3 [shape = 's32[2]{0}', space=sflag, size = 0x8, scoped, tag = 'scoped memory for two_layer_rnn_forward.1']
    #allocation4 [shape = 'u8[16384]{0}', space=vmem, size = 0x4000, scoped, tag = 'input window, operand 4, single buffered']
    #allocation5 [shape = 's32[1]{0}', space=sflag, size = 0x4, scoped, tag = 'scoped memory for two_layer_rnn_forward.1']
    #allocation6 [shape = 'u8[16384]{0}', space=vmem, size = 0x4000, scoped, tag = 'input window, operand 6, single buffered']
    %13 = vsyncpa [#allocation3], 0
    %14 = vsyncpa [#allocation5], 0
    loop: start=0, step=1, limit=4
    $region2: #{two_layer_rnn_forward.1} parent=1 // loop_pre_header
      _
    $region3: #{two_layer_rnn_forward.1} parent=1 // loop_header
      %s16 = sphi 0, %s20
      %p17 = scmp.ge.s32.totalorder %s16, 4
      %s26 = sphi 0, %s28
      %s29 = sphi 0, %s26
      %s30 = sphi 0, %s29
      %s46 = sphi 0, %s30
      %s50 = sphi 0, %s50
      %s52 = sphi 0, %s50
      %s53 = sphi 0, %s52
      %s67 = sphi 0, %s53
      %s71 = sphi 0, %s71
      %s73 = sphi 0, %s71
      %s74 = sphi 0, %s73
      %s88 = sphi 0, %s74
      %s92 = sphi 0, %s92
      %s94 = sphi 0, %s92
      %s95 = sphi 0, %s94
      %s109 = sphi 0, %s95
      %s113 = sphi 0, %s113
      %s115 = sphi 0, %s113
      %s116 = sphi 0, %s115
      %s130 = sphi 0, %s116
      %s134 = sphi 0, %s134
      %s136 = sphi 0, %s134
      %s137 = sphi 0, %s136
      %s151 = sphi 0, %s137
      %s155 = sphi 0, %s155
      %s157 = sphi 0, %s155
      %s158 = sphi 0, %s157
      %s172 = sphi 0, %s158
      %s176 = sphi 0, %s176
      %s178 = sphi 0, %s176
      %s179 = sphi 0, %s178
      %s193 = sphi 0, %s179
      %s199 = sphi 0, %s201
      %s202 = sphi 0, %s199
      %s203 = sphi 0, %s202
      %s219 = sphi 0, %s203
    $region4: #{two_layer_rnn_forward.1} parent=1 // loop_header_branch
      %19 = sbr.rel (%p17) target = $region8
    $region5: #{two_layer_rnn_forward.1} parent=1 // loop_body
      %s21 = ssub.s32 %s16, 1
      %s22 = ssub.s32 %s16, 2
      %s23 = sadd.s32 %s16, 1
      %s24 = ssub.s32 %s16, %s23
      %p25 = scmp.eq.s32.totalorder %s24, 0
      %s27 = sadd.s32 %s26, 1
      %s28 = scalar_select %p25, %s26, %s27
      %p31 = pneg %p25
      %p32 = scmp.eq.s32.totalorder %s16, 1
      %p33 = por %p31, %p32
      %p34 = scmp.ne.s32.totalorder %s26, %s29
      %p35 = scmp.eq.s32.totalorder %s16, 0
      %p36 = por %p34, %p35
      %p37 = scmp.ne.s32.totalorder %s26, %s29
      %p38 = scmp.eq.s32.totalorder %s21, 1
      %p39 = por %p37, %p38
      %p40 = scmp.ne.s32.totalorder %s29, %s30
      %p41 = scmp.eq.s32.totalorder %s21, 0
      %p42 = por %p40, %p41
      %p43 = scmp.ne.s32.totalorder %s29, %s30
      %p44 = scmp.eq.s32.totalorder %s22, 1
      %p45 = por %p43, %p44
      %p47 = scmp.ne.s32.totalorder %s30, %s46
      %p48 = scmp.eq.s32.totalorder %s22, 0
      %p49 = por %p47, %p48
      %s51 = sadd.s32 %s50, 1
      %p54 = scmp.eq.s32.totalorder %s16, 1
      %p55 = scmp.ne.s32.totalorder %s50, %s52
      %p56 = scmp.eq.s32.totalorder %s16, 0
      %p57 = por %p55, %p56
      %p58 = scmp.ne.s32.totalorder %s50, %s52
      %p59 = scmp.eq.s32.totalorder %s21, 1
      %p60 = por %p58, %p59
      %p61 = scmp.ne.s32.totalorder %s52, %s53
      %p62 = scmp.eq.s32.totalorder %s21, 0
      %p63 = por %p61, %p62
      %p64 = scmp.ne.s32.totalorder %s52, %s53
      %p65 = scmp.eq.s32.totalorder %s22, 1
      %p66 = por %p64, %p65
      %p68 = scmp.ne.s32.totalorder %s53, %s67
      %p69 = scmp.eq.s32.totalorder %s22, 0
      %p70 = por %p68, %p69
      %s72 = sadd.s32 %s71, 1
      %p75 = scmp.eq.s32.totalorder %s16, 1
      %p76 = scmp.ne.s32.totalorder %s71, %s73
      %p77 = scmp.eq.s32.totalorder %s16, 0
      %p78 = por %p76, %p77
      %p79 = scmp.ne.s32.totalorder %s71, %s73
      %p80 = scmp.eq.s32.totalorder %s21, 1
      %p81 = por %p79, %p80
      %p82 = scmp.ne.s32.totalorder %s73, %s74
      %p83 = scmp.eq.s32.totalorder %s21, 0
      %p84 = por %p82, %p83
      %p85 = scmp.ne.s32.totalorder %s73, %s74
      %p86 = scmp.eq.s32.totalorder %s22, 1
      %p87 = por %p85, %p86
      %p89 = scmp.ne.s32.totalorder %s74, %s88
      %p90 = scmp.eq.s32.totalorder %s22, 0
      %p91 = por %p89, %p90
      %s93 = sadd.s32 %s92, 1
      %p96 = scmp.eq.s32.totalorder %s16, 1
      %p97 = scmp.ne.s32.totalorder %s92, %s94
      %p98 = scmp.eq.s32.totalorder %s16, 0
      %p99 = por %p97, %p98
      %p100 = scmp.ne.s32.totalorder %s92, %s94
      %p101 = scmp.eq.s32.totalorder %s21, 1
      %p102 = por %p100, %p101
      %p103 = scmp.ne.s32.totalorder %s94, %s95
      %p104 = scmp.eq.s32.totalorder %s21, 0
      %p105 = por %p103, %p104
      %p106 = scmp.ne.s32.totalorder %s94, %s95
      %p107 = scmp.eq.s32.totalorder %s22, 1
      %p108 = por %p106, %p107
      %p110 = scmp.ne.s32.totalorder %s95, %s109
      %p111 = scmp.eq.s32.totalorder %s22, 0
      %p112 = por %p110, %p111
      %s114 = sadd.s32 %s113, 1
      %p117 = scmp.eq.s32.totalorder %s16, 1
      %p118 = scmp.ne.s32.totalorder %s113, %s115
      %p119 = scmp.eq.s32.totalorder %s16, 0
      %p120 = por %p118, %p119
      %p121 = scmp.ne.s32.totalorder %s113, %s115
      %p122 = scmp.eq.s32.totalorder %s21, 1
      %p123 = por %p121, %p122
      %p124 = scmp.ne.s32.totalorder %s115, %s116
      %p125 = scmp.eq.s32.totalorder %s21, 0
      %p126 = por %p124, %p125
      %p127 = scmp.ne.s32.totalorder %s115, %s116
      %p128 = scmp.eq.s32.totalorder %s22, 1
      %p129 = por %p127, %p128
      %p131 = scmp.ne.s32.totalorder %s116, %s130
      %p132 = scmp.eq.s32.totalorder %s22, 0
      %p133 = por %p131, %p132
      %s135 = sadd.s32 %s134, 1
      %p138 = scmp.eq.s32.totalorder %s16, 1
      %p139 = scmp.ne.s32.totalorder %s134, %s136
      %p140 = scmp.eq.s32.totalorder %s16, 0
      %p141 = por %p139, %p140
      %p142 = scmp.ne.s32.totalorder %s134, %s136
      %p143 = scmp.eq.s32.totalorder %s21, 1
      %p144 = por %p142, %p143
      %p145 = scmp.ne.s32.totalorder %s136, %s137
      %p146 = scmp.eq.s32.totalorder %s21, 0
      %p147 = por %p145, %p146
      %p148 = scmp.ne.s32.totalorder %s136, %s137
      %p149 = scmp.eq.s32.totalorder %s22, 1
      %p150 = por %p148, %p149
      %p152 = scmp.ne.s32.totalorder %s137, %s151
      %p153 = scmp.eq.s32.totalorder %s22, 0
      %p154 = por %p152, %p153
      %s156 = sadd.s32 %s155, 1
      %p159 = scmp.eq.s32.totalorder %s16, 1
      %p160 = scmp.ne.s32.totalorder %s155, %s157
      %p161 = scmp.eq.s32.totalorder %s16, 0
      %p162 = por %p160, %p161
      %p163 = scmp.ne.s32.totalorder %s155, %s157
      %p164 = scmp.eq.s32.totalorder %s21, 1
      %p165 = por %p163, %p164
      %p166 = scmp.ne.s32.totalorder %s157, %s158
      %p167 = scmp.eq.s32.totalorder %s21, 0
      %p168 = por %p166, %p167
      %p169 = scmp.ne.s32.totalorder %s157, %s158
      %p170 = scmp.eq.s32.totalorder %s22, 1
      %p171 = por %p169, %p170
      %p173 = scmp.ne.s32.totalorder %s158, %s172
      %p174 = scmp.eq.s32.totalorder %s22, 0
      %p175 = por %p173, %p174
      %s177 = sadd.s32 %s176, 1
      %p180 = scmp.eq.s32.totalorder %s16, 1
      %p181 = scmp.ne.s32.totalorder %s176, %s178
      %p182 = scmp.eq.s32.totalorder %s16, 0
      %p183 = por %p181, %p182
      %p184 = scmp.ne.s32.totalorder %s176, %s178
      %p185 = scmp.eq.s32.totalorder %s21, 1
      %p186 = por %p184, %p185
      %p187 = scmp.ne.s32.totalorder %s178, %s179
      %p188 = scmp.eq.s32.totalorder %s21, 0
      %p189 = por %p187, %p188
      %p190 = scmp.ne.s32.totalorder %s178, %s179
      %p191 = scmp.eq.s32.totalorder %s22, 1
      %p192 = por %p190, %p191
      %p194 = scmp.ne.s32.totalorder %s179, %s193
      %p195 = scmp.eq.s32.totalorder %s22, 0
      %p196 = por %p194, %p195
      %s197 = ssub.s32 %s16, %s23
      %p198 = scmp.eq.s32.totalorder %s197, 0
      %s200 = sadd.s32 %s199, 1
      %s201 = scalar_select %p198, %s199, %s200
      %p204 = pneg %p198
      %p205 = scmp.eq.s32.totalorder %s16, 1
      %p206 = por %p204, %p205
      %p207 = scmp.ne.s32.totalorder %s199, %s202
      %p208 = scmp.eq.s32.totalorder %s16, 0
      %p209 = por %p207, %p208
      %p210 = scmp.ne.s32.totalorder %s199, %s202
      %p211 = scmp.eq.s32.totalorder %s21, 1
      %p212 = por %p210, %p211
      %p213 = scmp.ne.s32.totalorder %s202, %s203
      %p214 = scmp.eq.s32.totalorder %s21, 0
      %p215 = por %p213, %p214
      %p216 = scmp.ne.s32.totalorder %s202, %s203
      %p217 = scmp.eq.s32.totalorder %s22, 1
      %p218 = por %p216, %p217
      %p220 = scmp.ne.s32.totalorder %s203, %s219
      %p221 = scmp.eq.s32.totalorder %s22, 0
      %p222 = por %p220, %p221
      %p223 = scmp.le.s32.totalorder 1, %s16
      %p224 = scmp.lt.s32.totalorder %s16, 3
      %p225 = pnand %p223, %p224
      %p226 = pneg %p225
      // Predicated region
      $region9: #{two_layer_rnn_forward.1} parent=5 // pred_check
        _
      $region10: #{two_layer_rnn_forward.1} parent=5 // pred_check_branch
        %228 = sbr.rel (%p225) target = $region12
      $region11: #{two_layer_rnn_forward.1} parent=5 // pred_region
        %s229 = ssub.s32 %s16, 1
        // Predicated region
        $region13: #{two_layer_rnn_forward.1} parent=11 // pred_check
          %p230 = pneg %p63
        $region14: #{two_layer_rnn_forward.1} parent=11 // pred_check_branch
          %232 = sbr.rel (%p230) target = $region16
        $region15: #{two_layer_rnn_forward.1} parent=11 // pred_region
          _
        $region16: #{two_layer_rnn_forward.1} parent=11 // pred_fallthru
          _
        // Predicated region
        $region17: #{two_layer_rnn_forward.1} parent=11 // pred_check
          %p233 = pneg %p84
        $region18: #{two_layer_rnn_forward.1} parent=11 // pred_check_branch
          %235 = sbr.rel (%p233) target = $region20
        $region19: #{two_layer_rnn_forward.1} parent=11 // pred_region
          %237 = vsyncadd [#allocation3], 0
          %s238 = sshll.u32 %s2, 4
          %s239 = int_to_ptr.hbm [resolvable:$true] %s238
          %s240 = sshll.u32 [#allocation2], 4
          %s241 = int_to_ptr.vmem [resolvable:$true] %s240
          %246 = dma.hbm_to_vmem [thread:$0]  %s239, 512, %s241, [#allocation3], 128, 128, 8
        $region20: #{two_layer_rnn_forward.1} parent=11 // pred_fallthru
          _
        // Predicated region
        $region21: #{two_layer_rnn_forward.1} parent=11 // pred_check
          %p247 = pneg %p105
        $region22: #{two_layer_rnn_forward.1} parent=11 // pred_check_branch
          %249 = sbr.rel (%p247) target = $region24
        $region23: #{two_layer_rnn_forward.1} parent=11 // pred_region
          _
        $region24: #{two_layer_rnn_forward.1} parent=11 // pred_fallthru
          _
        // Predicated region
        $region25: #{two_layer_rnn_forward.1} parent=11 // pred_check
          %p250 = pneg %p126
        $region26: #{two_layer_rnn_forward.1} parent=11 // pred_check_branch
          %252 = sbr.rel (%p250) target = $region28
        $region27: #{two_layer_rnn_forward.1} parent=11 // pred_region
          %254 = vsyncadd [#allocation5], 0
          %s255 = sshll.u32 %s4, 4
          %s256 = int_to_ptr.hbm [resolvable:$true] %s255
          %s257 = sshll.u32 [#allocation4], 4
          %s258 = int_to_ptr.vmem [resolvable:$true] %s257
          %263 = dma.hbm_to_vmem [thread:$0]  %s256, 512, %s258, [#allocation5], 128, 128, 8
        $region28: #{two_layer_rnn_forward.1} parent=11 // pred_fallthru
          _
        // Predicated region
        $region29: #{two_layer_rnn_forward.1} parent=11 // pred_check
          %p264 = pneg %p147
        $region30: #{two_layer_rnn_forward.1} parent=11 // pred_check_branch
          %266 = sbr.rel (%p264) target = $region32
        $region31: #{two_layer_rnn_forward.1} parent=11 // pred_region
          _
        $region32: #{two_layer_rnn_forward.1} parent=11 // pred_fallthru
          _
        // Predicated region
        $region33: #{two_layer_rnn_forward.1} parent=11 // pred_check
          %p267 = pneg %p168
        $region34: #{two_layer_rnn_forward.1} parent=11 // pred_check_branch
          %269 = sbr.rel (%p267) target = $region36
        $region35: #{two_layer_rnn_forward.1} parent=11 // pred_region
          %271 = vsyncadd [#allocation5], 0
          %s272 = sshll.u32 %s6, 4
          %s273 = int_to_ptr.hbm [resolvable:$true] %s272
          %s274 = sshll.u32 [#allocation6], 4
          %s275 = int_to_ptr.vmem [resolvable:$true] %s274
          %280 = dma.hbm_to_vmem [thread:$0]  %s273, 512, %s275, [#allocation5], 128, 128, 8
        $region36: #{two_layer_rnn_forward.1} parent=11 // pred_fallthru
          _
        // Predicated region
        $region37: #{two_layer_rnn_forward.1} parent=11 // pred_check
          %p281 = pneg %p189
        $region38: #{two_layer_rnn_forward.1} parent=11 // pred_check_branch
          %283 = sbr.rel (%p281) target = $region40
        $region39: #{two_layer_rnn_forward.1} parent=11 // pred_region
          _
        $region40: #{two_layer_rnn_forward.1} parent=11 // pred_fallthru
          _
      $region12: #{two_layer_rnn_forward.1} parent=5 // pred_fallthru
        _
      %p284 = scmp.lt.s32.totalorder %s16, 2
      // Predicated region
      $region41: #{two_layer_rnn_forward.1} parent=5 // pred_check
        %p285 = pneg %p284
      $region42: #{two_layer_rnn_forward.1} parent=5 // pred_check_branch
        %287 = sbr.rel (%p285) target = $region44
      $region43: #{two_layer_rnn_forward.1} parent=5 // pred_region
        // Predicated region
        $region45: #{two_layer_rnn_forward.1} parent=43 // pred_check
          %p288 = pneg %p36
        $region46: #{two_layer_rnn_forward.1} parent=43 // pred_check_branch
          %290 = sbr.rel (%p288) target = $region48
        $region47: #{two_layer_rnn_forward.1} parent=43 // pred_region
          %p291 = scmp.lt.s32.totalorder %s16, 1
          %s292 = scalar_select %p291, %s16, 1
          %s293 = smul.addr %s292, 8
          %s294 = scalar_lea.vmem %s0, %s293
        $region48: #{two_layer_rnn_forward.1} parent=43 // pred_fallthru
          _
      $region44: #{two_layer_rnn_forward.1} parent=5 // pred_fallthru
        _
      %p295 = scmp.le.s32.totalorder 1, %s16
      %p296 = scmp.lt.s32.totalorder %s16, 3
      %p297 = pnand %p295, %p296
      %p298 = pneg %p297
      // Predicated region
      $region49: #{two_layer_rnn_forward.1} parent=5 // pred_check
        _
      $region50: #{two_layer_rnn_forward.1} parent=5 // pred_check_branch
        %300 = sbr.rel (%p297) target = $region52
      $region51: #{two_layer_rnn_forward.1} parent=5 // pred_region
        %s301 = ssub.s32 %s16, 1
        // Predicated region
        $region53: #{two_layer_rnn_forward.1} parent=51 // pred_check
          %p302 = pneg %p84
        $region54: #{two_layer_rnn_forward.1} parent=51 // pred_check_branch
          %304 = sbr.rel (%p302) target = $region56
        $region55: #{two_layer_rnn_forward.1} parent=51 // pred_region
          %306 = dma.done [#allocation3], 512
        $region56: #{two_layer_rnn_forward.1} parent=51 // pred_fallthru
          _
        // Predicated region
        $region57: #{two_layer_rnn_forward.1} parent=51 // pred_check
          %p307 = pneg %p126
        $region58: #{two_layer_rnn_forward.1} parent=51 // pred_check_branch
          %309 = sbr.rel (%p307) target = $region60
        $region59: #{two_layer_rnn_forward.1} parent=51 // pred_region
          %311 = dma.done [#allocation5], 512
        $region60: #{two_layer_rnn_forward.1} parent=51 // pred_fallthru
          _
        // Predicated region
        $region61: #{two_layer_rnn_forward.1} parent=51 // pred_check
          %p312 = pneg %p168
        $region62: #{two_layer_rnn_forward.1} parent=51 // pred_check_branch
          %314 = sbr.rel (%p312) target = $region64
        $region63: #{two_layer_rnn_forward.1} parent=51 // pred_region
          %316 = dma.done [#allocation5], 512
        $region64: #{two_layer_rnn_forward.1} parent=51 // pred_fallthru
          _
        %p317 = scmp.lt.s32.totalorder %s21, 1
        %s318 = scalar_select %p317, %s21, 1
        %s319 = smul.addr %s318, 8
        %s320 = scalar_lea.vmem %s0, %s319
        %p321 = pneg %p42
        %p322 = pneg %p39
        %p323 = pneg %p63
        %p324 = pneg %p60
        %p325 = pneg %p84
        %p326 = pneg %p81
        %p327 = pneg %p105
        %p328 = pneg %p102
        %p329 = pneg %p126
        %p330 = pneg %p123
        %p331 = pneg %p147
        %p332 = pneg %p144
        %p333 = pneg %p168
        %p334 = pneg %p165
        %p335 = pneg %p189
        %p336 = pneg %p186
        %p337 = pneg %p215
        %p338 = pneg %p212
        %p339 = scmp.lt.s32.totalorder %s21, 1
        %s340 = scalar_select %p339, %s21, 1
        %s341 = smul.addr %s340, 8
        %s342 = scalar_lea.vmem %s8, %s341
        %p343 = scmp.lt.s32.totalorder %s21, 1
        %s344 = scalar_select %p343, %s21, 1
        %s345 = smul.addr %s344, 8
        %s346 = scalar_lea.vmem %s0, %s345
        %p347 = scmp.lt.s32.totalorder %s21, 1
        %s348 = scalar_select %p347, %s21, 1
        %s349 = smul.addr %s348, 8
        %s350 = scalar_lea.vmem %s8, %s349
        %v351 = vld [vmem:[%s346] sm:$0xff]
        %v352 = vlaneseq
        %v353 = vand.u32 %v352, 127
        %354 = vset.pattern.permute.xlu0 0
        %355 = vperm.xlu0 %354, %v351
        %v356 = vpop.permute.xlu0 %355
        %vm357 = vcmp.eq.s32.totalorder %v356, %v353
        %v358 = vsel %vm357, 1, 0
        %v359 = vcvt.s32.f32 %v358
        %v360 = vld [vmem:[%s1] sm:$0xff]
        %v361 = vld [vmem:[%s1 + $0x8] sm:$0xff]
        %vm362 = vcmask 130048
        %v364 = vsel %vm362, %v359, 0
        %366 = vmatpush.msra.mxu0 0.0
        %367 = vmatpush.msra.mxu0 0.0
        %368 = vmatpush.msra.mxu0 0.0
        %369 = vmatpush.msra.mxu0 0.0
        %370 = vmatpush.msra.mxu0 0.0
        %371 = vmatpush.msra.mxu0 0.0
        %372 = vmatpush.msra.mxu0 0.0
        %373 = vmatpush.msra.mxu0 0.0
        %374 = vmatpush.msra.mxu0 0.0
        %375 = vmatpush.msra.mxu0 0.0
        %376 = vmatpush.msra.mxu0 0.0
        %377 = vmatpush.msra.mxu0 0.0
        %378 = vmatpush.msra.mxu0 0.0
        %379 = vmatpush.msra.mxu0 0.0
        %380 = vmatpush.msra.mxu0 %v361
        %381 = vmatpush.msra.mxu0 %v360
        %382 = vmatmul.f32.gmra.mxu0 %v364
        %v383 = vpop.f32.mrf.mxu0
        %v384 = vadd.f32 0.0, %v383
        %385 = vdwg.mxu0
        %v386 = vld [vmem:[#allocation2] sm:$0xff]
        %v387 = vld [vmem:[#allocation2 + $0x8] sm:$0xff]
        %v388 = vld [vmem:[#allocation2 + $0x10] sm:$0xff]
        %v389 = vld [vmem:[#allocation2 + $0x18] sm:$0xff]
        %v390 = vld [vmem:[%s3] sm:$0x1]
        %v392 = vperm.slane %v390, 0
        %vm394 = vcmask 261120
        %v396 = vsel %vm394, %v384, 0
        %398 = vmatpush.msra.mxu0 0.0
        %399 = vmatpush.msra.mxu0 0.0
        %400 = vmatpush.msra.mxu0 0.0
        %401 = vmatpush.msra.mxu0 0.0
        %402 = vmatpush.msra.mxu0 0.0
        %403 = vmatpush.msra.mxu0 0.0
        %404 = vmatpush.msra.mxu0 0.0
        %405 = vmatpush.msra.mxu0 0.0
        %406 = vmatpush.msra.mxu0 0.0
        %407 = vmatpush.msra.mxu0 0.0
        %408 = vmatpush.msra.mxu0 0.0
        %409 = vmatpush.msra.mxu0 0.0
        %410 = vmatpush.msra.mxu0 %v389
        %411 = vmatpush.msra.mxu0 %v388
        %412 = vmatpush.msra.mxu0 %v387
        %413 = vmatpush.msra.mxu0 %v386
        %414 = vmatmul.f32.gmra.mxu0 %v396
        %v415 = vpop.f32.mrf.mxu0
        %v416 = vadd.f32 %v392, %v415
        %417 = vdwg.mxu0
        %v418 = vmax.f32 %v416, 0.0
        %v419 = vld [vmem:[#allocation4] sm:$0xff]
        %v420 = vld [vmem:[#allocation4 + $0x8] sm:$0xff]
        %v421 = vld [vmem:[#allocation4 + $0x10] sm:$0xff]
        %v422 = vld [vmem:[#allocation4 + $0x18] sm:$0xff]
        %v423 = vld [vmem:[%s5] sm:$0x1]
        %v425 = vperm.slane %v423, 0
        %v428 = vsel %vm394, %v418, 0
        %430 = vmatpush.msra.mxu0 0.0
        %431 = vmatpush.msra.mxu0 0.0
        %432 = vmatpush.msra.mxu0 0.0
        %433 = vmatpush.msra.mxu0 0.0
        %434 = vmatpush.msra.mxu0 0.0
        %435 = vmatpush.msra.mxu0 0.0
        %436 = vmatpush.msra.mxu0 0.0
        %437 = vmatpush.msra.mxu0 0.0
        %438 = vmatpush.msra.mxu0 0.0
        %439 = vmatpush.msra.mxu0 0.0
        %440 = vmatpush.msra.mxu0 0.0
        %441 = vmatpush.msra.mxu0 0.0
        %442 = vmatpush.msra.mxu0 %v422
        %443 = vmatpush.msra.mxu0 %v421
        %444 = vmatpush.msra.mxu0 %v420
        %445 = vmatpush.msra.mxu0 %v419
        %446 = vmatmul.f32.gmra.mxu0 %v428
        %v447 = vpop.f32.mrf.mxu0
        %v448 = vadd.f32 %v425, %v447
        %449 = vdwg.mxu0
        %v450 = vmax.f32 %v448, 0.0
        %v451 = vld [vmem:[#allocation6] sm:$0xff]
        %v452 = vld [vmem:[#allocation6 + $0x8] sm:$0xff]
        %v453 = vld [vmem:[#allocation6 + $0x10] sm:$0xff]
        %v454 = vld [vmem:[#allocation6 + $0x18] sm:$0xff]
        %v455 = vld [vmem:[%s7] sm:$0x1]
        %v457 = vperm.slane %v455, 0
        %v460 = vsel %vm394, %v450, 0
        %462 = vmatpush.msra.mxu0 0.0
        %463 = vmatpush.msra.mxu0 0.0
        %464 = vmatpush.msra.mxu0 0.0
        %465 = vmatpush.msra.mxu0 0.0
        %466 = vmatpush.msra.mxu0 0.0
        %467 = vmatpush.msra.mxu0 0.0
        %468 = vmatpush.msra.mxu0 0.0
        %469 = vmatpush.msra.mxu0 0.0
        %470 = vmatpush.msra.mxu0 0.0
        %471 = vmatpush.msra.mxu0 0.0
        %472 = vmatpush.msra.mxu0 0.0
        %473 = vmatpush.msra.mxu0 0.0
        %474 = vmatpush.msra.mxu0 %v454
        %475 = vmatpush.msra.mxu0 %v453
        %476 = vmatpush.msra.mxu0 %v452
        %477 = vmatpush.msra.mxu0 %v451
        %478 = vmatmul.f32.gmra.mxu0 %v460
        %v479 = vpop.f32.mrf.mxu0
        %v480 = vadd.f32 %v457, %v479
        %481 = vdwg.mxu0
        %482 = vst [vmem:[%s350] sm:$0xff] %v480
        %p483 = scmp.lt.s32.totalorder %s21, 1
        %s484 = scalar_select %p483, %s21, 1
        %s485 = smul.addr %s484, 8
        %s486 = scalar_lea.vmem %s8, %s485
        // Predicated region
        $region65: #{two_layer_rnn_forward.1} parent=51 // pred_check
          %p487 = pneg %p212
        $region66: #{two_layer_rnn_forward.1} parent=51 // pred_check_branch
          %489 = sbr.rel (%p487) target = $region68
        $region67: #{two_layer_rnn_forward.1} parent=51 // pred_region
          _
        $region68: #{two_layer_rnn_forward.1} parent=51 // pred_fallthru
          _
      $region52: #{two_layer_rnn_forward.1} parent=5 // pred_fallthru
        _
      %p490 = scmp.le.s32.totalorder 2, %s16
      // Predicated region
      $region69: #{two_layer_rnn_forward.1} parent=5 // pred_check
        %p491 = pneg %p490
      $region70: #{two_layer_rnn_forward.1} parent=5 // pred_check_branch
        %493 = sbr.rel (%p491) target = $region72
      $region71: #{two_layer_rnn_forward.1} parent=5 // pred_region
        %s494 = ssub.s32 %s16, 2
        // Predicated region
        $region73: #{two_layer_rnn_forward.1} parent=71 // pred_check
          %p495 = pneg %p218
        $region74: #{two_layer_rnn_forward.1} parent=71 // pred_check_branch
          %497 = sbr.rel (%p495) target = $region76
        $region75: #{two_layer_rnn_forward.1} parent=71 // pred_region
          %p498 = scmp.lt.s32.totalorder %s22, 1
          %s499 = scalar_select %p498, %s22, 1
          %s500 = smul.addr %s499, 8
          %s501 = scalar_lea.vmem %s8, %s500
        $region76: #{two_layer_rnn_forward.1} parent=71 // pred_fallthru
          _
      $region72: #{two_layer_rnn_forward.1} parent=5 // pred_fallthru
        _
    $region6: #{two_layer_rnn_forward.1} parent=1 // loop_footer
      %s20 = sadd.s32 1, %s16
    $region7: #{two_layer_rnn_forward.1} parent=1 // loop_footer_branch
      %15 = sbr.rel target = $region3
    $region8: #{two_layer_rnn_forward.1} parent=1 // loop_exit
      _
    %502 = vsyncpa [#allocation3], 1
    %s503 = scalar_lea.sflag [#allocation3], 1
    %504 = vsyncpa %s503, 1
    %505 = vsyncpa [#allocation5], 1

</llo_original>
